<compile_context>
chip_gen: v7x
topology: tpu7x:2x2x1
jax: 0.10.0
libtpu: 0.0.40
codegen_flags: <defaults>
</compile_context>

<pallas_src>
import jax
import jax.numpy as jnp
from jax.experimental import pallas as pl
from jax.experimental.pallas import tpu as pltpu


def _round_up(x, m):
    return (x + m - 1) // m * m


def qnet_kernel(x_ref, w1_ref, b1_ref, w2_ref, b2_ref, out_ref):
    # Hidden layer: h = relu(x @ W1 + b1), accumulated and kept in f32.
    h = jnp.dot(x_ref[...], w1_ref[...], preferred_element_type=jnp.float32)
    h = jnp.maximum(h + b1_ref[...].astype(jnp.float32), 0.0)
    # Output layer: y = h @ W2 + b2, written at the true output width.
    y = jnp.dot(h.astype(w2_ref.dtype), w2_ref[...],
                preferred_element_type=jnp.float32)
    y = y + b2_ref[...].astype(jnp.float32)
    out_ref[...] = y.astype(out_ref.dtype)


def linear_qnet_forward(x, w1, b1, w2, b2, *,
                        max_batch_tile=1024, min_pallas_batch=16):
    """Forward pass of Linear_QNet.

    x: (B, in), w1: (in, H), b1: (1, H), w2: (H, out), b2: (1, out).
    Returns (B, out) with dtype of x.
    """
    B, in_f = x.shape
    H = w1.shape[1]
    out_f = w2.shape[1]

    # Per-frame inference path: a single ~1 KFLOP sample is cheaper through XLA's
    # fused matmuls than through a pallas_call launch + one grid step.
    if B < min_pallas_batch:
        h = jnp.maximum(
            jnp.dot(x, w1, preferred_element_type=jnp.float32)
            + b1.astype(jnp.float32), 0.0)
        y = jnp.dot(h.astype(w2.dtype), w2, preferred_element_type=jnp.float32)
        return (y + b2.astype(jnp.float32)).astype(x.dtype)

    # Batch tile: sublane-aligned, collapsing typical (<= max_batch_tile) batches to a
    # single grid step. Larger batches split into multiple steps; the ragged last block
    # is handled by Pallas (masked writeback). VMEM at tb=1024 is only a few MiB — safe
    # on every generation, including v7x's 64 MiB.
    tb = min(_round_up(B, 8), _round_up(max_batch_tile, 8))
    grid = (pl.cdiv(B, tb),)

    grid_spec = pltpu.PrefetchScalarGridSpec(
        num_scalar_prefetch=0,
        grid=grid,
        in_specs=[
            # Batch-tiled activations: pipelined block per grid step (ragged last block).
            pl.BlockSpec((tb, in_f), lambda i: (i, 0)),
            # Weights / biases: constant index_map -> fetched once, VMEM-resident.
            pl.BlockSpec((in_f, H), lambda i: (0, 0)),
            pl.BlockSpec((1, H), lambda i: (0, 0)),
            pl.BlockSpec((H, out_f), lambda i: (0, 0)),
            pl.BlockSpec((1, out_f), lambda i: (0, 0)),
        ],
        out_specs=pl.BlockSpec((tb, out_f), lambda i: (i, 0)),
    )

    return pl.pallas_call(
        qnet_kernel,
        out_shape=jax.ShapeDtypeStruct((B, out_f), x.dtype),
        grid_spec=grid_spec,
        compiler_params=pltpu.CompilerParams(
            dimension_semantics=("parallel",)),
    )(x, w1, b1, w2, b2)


def init_params(key, input_size, hidden_size, output_size, dtype=jnp.float32):
    """Deterministic init mimicking PyTorch nn.Linear default U[-1/sqrt(fan_in), +1/sqrt(fan_in)]."""
    k1, k2, k3, k4 = jax.random.split(key, 4)
    bound1 = 1.0 / (input_size ** 0.5)
    bound2 = 1.0 / (hidden_size ** 0.5)
    w1 = jax.random.uniform(k1, (input_size, hidden_size), dtype, -bound1, bound1)
    b1 = jax.random.uniform(k2, (1, hidden_size), dtype, -bound1, bound1)
    w2 = jax.random.uniform(k3, (hidden_size, output_size), dtype, -bound2, bound2)
    b2 = jax.random.uniform(k4, (1, output_size), dtype, -bound2, bound2)
    return w1, b1, w2, b2


def reference_forward(x, w1, b1, w2, b2):
    h = jnp.maximum(x @ w1 + b1, 0.0)
    return h @ w2 + b2


if __name__ == "__main__":
    # Snake-RL Linear_QNet config: input=11, hidden=32, output=3.
    input_size, hidden_size, output_size = 11, 32, 3

    key = jax.random.PRNGKey(0)
    kx, kp, kx2 = jax.random.split(key, 3)
    w1, b1, w2, b2 = init_params(kp, input_size, hidden_size, output_size)

    # 1) Tiny per-frame inference batch (B=4): takes the XLA bypass path.
    x_small = jax.random.normal(kx, (4, input_size), dtype=jnp.float32)
    out_small = jax.block_until_ready(linear_qnet_forward(x_small, w1, b1, w2, b2))
    ref_small = reference_forward(x_small, w1, b1, w2, b2)
    assert out_small.shape == (4, output_size)
    assert jnp.allclose(out_small, ref_small, atol=1e-5, rtol=1e-5), "mismatch (B=4)"

    # 2) Replay-buffer batch (B=300): single grid step (tb=304, ragged block),
    #    resident weights, true-width (unpadded) output.
    x_big = jax.random.normal(kx2, (300, input_size), dtype=jnp.float32)
    out_big = jax.block_until_ready(linear_qnet_forward(x_big, w1, b1, w2, b2))
    ref_big = reference_forward(x_big, w1, b1, w2, b2)
    assert out_big.shape == (300, output_size)
    assert jnp.allclose(out_big, ref_big, atol=1e-5, rtol=1e-5), "mismatch (B=300, 1 step)"

    # 3) Same batch forced through a multi-step grid (tb=128 -> 3 steps, ragged last
    #    block) to exercise the pipelined / megacore-shardable path.
    out_multi = jax.block_until_ready(
        linear_qnet_forward(x_big, w1, b1, w2, b2, max_batch_tile=128))
    assert out_multi.shape == (300, output_size)
    assert jnp.allclose(out_multi, ref_big, atol=1e-5, rtol=1e-5), "mismatch (B=300, 3 steps)"

    print("KERNEL_OK")
</pallas_src>

<mosaic_0001>
module attributes {stable_mosaic.version = 11 : i64} {
  func.func @qnet_kernel(%arg0: i32, %arg1: memref<304x11xf32, #tpu.memory_space<vmem>>, %arg2: memref<11x32xf32, #tpu.memory_space<vmem>>, %arg3: memref<1x32xf32, #tpu.memory_space<vmem>>, %arg4: memref<32x3xf32, #tpu.memory_space<vmem>>, %arg5: memref<1x3xf32, #tpu.memory_space<vmem>>, %arg6: memref<304x3xf32, #tpu.memory_space<vmem>>) attributes {dimension_semantics = [#tpu.dimension_semantics<parallel>], iteration_bounds = array<i64: 1>, scalar_prefetch = 0 : i64, scratch_operands = 0 : i64, tpu.core_type = #tpu.core_type<tc>, window_params = [{transform_indices = @transform_0, window_bounds = array<i64: 304, 11>}, {pipeline_mode = #tpu.pipeline_mode<synchronous>, transform_indices = @transform_1, window_bounds = array<i64: 11, 32>}, {pipeline_mode = #tpu.pipeline_mode<synchronous>, transform_indices = @transform_2, window_bounds = array<i64: 1, 32>}, {pipeline_mode = #tpu.pipeline_mode<synchronous>, transform_indices = @transform_3, window_bounds = array<i64: 32, 3>}, {pipeline_mode = #tpu.pipeline_mode<synchronous>, transform_indices = @transform_4, window_bounds = array<i64: 1, 3>}, {transform_indices = @transform_5, window_bounds = array<i64: 304, 3>}]} {
    %c0 = arith.constant 0 : index
    %c0_0 = arith.constant 0 : index
    %0 = vector.load %arg1[%c0, %c0_0] : memref<304x11xf32, #tpu.memory_space<vmem>>, vector<304x11xf32>
    %c0_1 = arith.constant 0 : index
    %c0_2 = arith.constant 0 : index
    %1 = vector.load %arg2[%c0_1, %c0_2] : memref<11x32xf32, #tpu.memory_space<vmem>>, vector<11x32xf32>
    %cst = arith.constant dense<0.000000e+00> : vector<304x32xf32>
    %2 = tpu.matmul %0, %1, %cst {dimension_numbers = #tpu.dot_dimension_numbers<[1], [0], [0], [1], [0, 0, 1, 1], [], []>} : vector<304x11xf32>, vector<11x32xf32>, vector<304x32xf32> -> vector<304x32xf32>
    %c0_3 = arith.constant 0 : index
    %c0_4 = arith.constant 0 : index
    %3 = vector.load %arg3[%c0_3, %c0_4] : memref<1x32xf32, #tpu.memory_space<vmem>>, vector<1x32xf32>
    %4 = vector.broadcast %3 : vector<1x32xf32> to vector<304x32xf32>
    %5 = arith.addf %2, %4 : vector<304x32xf32>
    %cst_5 = arith.constant 0.000000e+00 : f32
    %6 = vector.broadcast %cst_5 : f32 to vector<304x32xf32>
    %7 = arith.maximumf %5, %6 : vector<304x32xf32>
    %c0_6 = arith.constant 0 : index
    %c0_7 = arith.constant 0 : index
    %8 = vector.load %arg4[%c0_6, %c0_7] : memref<32x3xf32, #tpu.memory_space<vmem>>, vector<32x3xf32>
    %cst_8 = arith.constant dense<0.000000e+00> : vector<304x3xf32>
    %9 = tpu.matmul %7, %8, %cst_8 {dimension_numbers = #tpu.dot_dimension_numbers<[1], [0], [0], [1], [0, 0, 1, 1], [], []>} : vector<304x32xf32>, vector<32x3xf32>, vector<304x3xf32> -> vector<304x3xf32>
    %c0_9 = arith.constant 0 : index
    %c0_10 = arith.constant 0 : index
    %10 = vector.load %arg5[%c0_9, %c0_10] : memref<1x3xf32, #tpu.memory_space<vmem>>, vector<1x3xf32>
    %11 = vector.broadcast %10 : vector<1x3xf32> to vector<304x3xf32>
    %12 = arith.addf %9, %11 : vector<304x3xf32>
    %c0_11 = arith.constant 0 : index
    %c0_12 = arith.constant 0 : index
    %13 = vector.load %arg6[%c0_11, %c0_12] : memref<304x3xf32, #tpu.memory_space<vmem>>, vector<304x3xf32>
    tpu.vector_store %arg6[%c0_11, %c0_12], %12 {strides = array<i32>} : memref<304x3xf32, #tpu.memory_space<vmem>>, vector<304x3xf32>,
    return
  }
  func.func @transform_0(%arg0: i32) -> (i32, i32) {
    %c0_i32 = arith.constant 0 : i32
    %c0_i32_0 = arith.constant 0 : i32
    return %arg0, %c0_i32 : i32, i32
  }
  func.func @transform_1(%arg0: i32) -> (i32, i32) {
    %c0_i32 = arith.constant 0 : i32
    %c0_i32_0 = arith.constant 0 : i32
    %c0_i32_1 = arith.constant 0 : i32
    return %c0_i32, %c0_i32_0 : i32, i32
  }
  func.func @transform_2(%arg0: i32) -> (i32, i32) {
    %c0_i32 = arith.constant 0 : i32
    %c0_i32_0 = arith.constant 0 : i32
    %c0_i32_1 = arith.constant 0 : i32
    return %c0_i32, %c0_i32_0 : i32, i32
  }
  func.func @transform_3(%arg0: i32) -> (i32, i32) {
    %c0_i32 = arith.constant 0 : i32
    %c0_i32_0 = arith.constant 0 : i32
    %c0_i32_1 = arith.constant 0 : i32
    return %c0_i32, %c0_i32_0 : i32, i32
  }
  func.func @transform_4(%arg0: i32) -> (i32, i32) {
    %c0_i32 = arith.constant 0 : i32
    %c0_i32_0 = arith.constant 0 : i32
    %c0_i32_1 = arith.constant 0 : i32
    return %c0_i32, %c0_i32_0 : i32, i32
  }
  func.func @transform_5(%arg0: i32) -> (i32, i32) {
    %c0_i32 = arith.constant 0 : i32
    %c0_i32_0 = arith.constant 0 : i32
    return %arg0, %c0_i32 : i32, i32
  }
}

</mosaic_0001>

<llo_original>
// kernel: tpu_custom_call.1
$region0: #{tpu_custom_call.1}
  #allocation0 [shape = 'u32[]', space=smem, size = 0x4, offset = 0x4, fixed_abs, tag = 'smem constant byte address 0x4 - core index']
  #allocation1 [shape = 'u32[144,128]{1,0:T(1,128)}', space=vmem, size = 0x12000, scoped, tag = 'internal scratch']
  %s0 = inlined_call_operand.vmem [shape: f32[300,11], index: 0, kind: input, shape index: {}]
  %s1 = inlined_call_operand.vmem [shape: f32[11,32], index: 1, kind: input, shape index: {}]
  %s2 = inlined_call_operand.vmem [shape: f32[1,32], index: 2, kind: input, shape index: {}]
  %s3 = inlined_call_operand.vmem [shape: f32[32,3], index: 3, kind: input, shape index: {}]
  %s4 = inlined_call_operand.vmem [shape: f32[1,3], index: 4, kind: input, shape index: {}]
  %s5 = inlined_call_operand.vmem [shape: f32[300,3], index: 5, kind: output, shape index: {}]
  %s6 = sld [smem:[#allocation0]]
  $region30: #{tpu_custom_call.1} parent=0
    _
  %s8 = ssub.s32 1, %s6
  %s9 = scalar_select 0, %s8, %s6
  // Predicated region
  $region2: #{tpu_custom_call.1} parent=0 // pred_check
    _
  $region3: #{tpu_custom_call.1} parent=0 // pred_check_branch
    %11 = sbr.rel (0) target = $region5
  $region4: #{tpu_custom_call.1} parent=0 // pred_region
    _
  $region5: #{tpu_custom_call.1} parent=0 // pred_fallthru
    _
  // Predicated region
  $region6: #{tpu_custom_call.1} parent=0 // pred_check
    _
  $region7: #{tpu_custom_call.1} parent=0 // pred_check_branch
    %13 = sbr.rel (0) target = $region9
  $region8: #{tpu_custom_call.1} parent=0 // pred_region
    _
  $region9: #{tpu_custom_call.1} parent=0 // pred_fallthru
    _
  // Predicated region
  $region10: #{tpu_custom_call.1} parent=0 // pred_check
    _
  $region11: #{tpu_custom_call.1} parent=0 // pred_check_branch
    %15 = sbr.rel (0) target = $region13
  $region12: #{tpu_custom_call.1} parent=0 // pred_region
    _
  $region13: #{tpu_custom_call.1} parent=0 // pred_fallthru
    _
  // Predicated region
  $region14: #{tpu_custom_call.1} parent=0 // pred_check
    _
  $region15: #{tpu_custom_call.1} parent=0 // pred_check_branch
    %17 = sbr.rel (0) target = $region17
  $region16: #{tpu_custom_call.1} parent=0 // pred_region
    _
  $region17: #{tpu_custom_call.1} parent=0 // pred_fallthru
    _
  // Predicated region
  $region18: #{tpu_custom_call.1} parent=0 // pred_check
    _
  $region19: #{tpu_custom_call.1} parent=0 // pred_check_branch
    %19 = sbr.rel (0) target = $region21
  $region20: #{tpu_custom_call.1} parent=0 // pred_region
    _
  $region21: #{tpu_custom_call.1} parent=0 // pred_fallthru
    _
  %v20 = vld [vmem:[%s0] sm:$0xff]
  %v21 = vld [vmem:[%s0 + $0x8] sm:$0xff]
  %v22 = vld [vmem:[%s0 + $0x10] sm:$0xff]
  %v23 = vld [vmem:[%s0 + $0x18] sm:$0xff]
  %v24 = vld [vmem:[%s0 + $0x20] sm:$0xff]
  %v25 = vld [vmem:[%s0 + $0x28] sm:$0xff]
  %v26 = vld [vmem:[%s0 + $0x30] sm:$0xff]
  %v27 = vld [vmem:[%s0 + $0x38] sm:$0xff]
  %v28 = vld [vmem:[%s0 + $0x40] sm:$0xff]
  %v29 = vld [vmem:[%s0 + $0x48] sm:$0xff]
  %v30 = vld [vmem:[%s0 + $0x50] sm:$0xff]
  %v31 = vld [vmem:[%s0 + $0x58] sm:$0xff]
  %v32 = vld [vmem:[%s0 + $0x60] sm:$0xff]
  %v33 = vld [vmem:[%s0 + $0x68] sm:$0xff]
  %v34 = vld [vmem:[%s0 + $0x70] sm:$0xff]
  %v35 = vld [vmem:[%s0 + $0x78] sm:$0xff]
  %v36 = vld [vmem:[%s0 + $0x80] sm:$0xff]
  %v37 = vld [vmem:[%s0 + $0x88] sm:$0xff]
  %v38 = vld [vmem:[%s0 + $0x90] sm:$0xff]
  %v39 = vld [vmem:[%s0 + $0x98] sm:$0xff]
  %v40 = vld [vmem:[%s0 + $0xa0] sm:$0xff]
  %v41 = vld [vmem:[%s0 + $0xa8] sm:$0xff]
  %v42 = vld [vmem:[%s0 + $0xb0] sm:$0xff]
  %v43 = vld [vmem:[%s0 + $0xb8] sm:$0xff]
  %v44 = vld [vmem:[%s0 + $0xc0] sm:$0xff]
  %v45 = vld [vmem:[%s0 + $0xc8] sm:$0xff]
  %v46 = vld [vmem:[%s0 + $0xd0] sm:$0xff]
  %v47 = vld [vmem:[%s0 + $0xd8] sm:$0xff]
  %v48 = vld [vmem:[%s0 + $0xe0] sm:$0xff]
  %v49 = vld [vmem:[%s0 + $0xe8] sm:$0xff]
  %v50 = vld [vmem:[%s0 + $0xf0] sm:$0xff]
  %v51 = vld [vmem:[%s0 + $0xf8] sm:$0xff]
  %v52 = vld [vmem:[%s0 + $0x100] sm:$0xff]
  %v53 = vld [vmem:[%s0 + $0x108] sm:$0xff]
  %v54 = vld [vmem:[%s0 + $0x110] sm:$0xff]
  %v55 = vld [vmem:[%s0 + $0x118] sm:$0xff]
  %v56 = vld [vmem:[%s0 + $0x120] sm:$0xff]
  %v57 = vld [vmem:[%s0 + $0x128] sm:$0xff]
  %v58 = vld [vmem:[%s1] sm:$0xff]
  %v59 = vld [vmem:[%s1 + $0x8] sm:$0x7]
  %v60 = vld [vmem:[%s2] sm:$0x1]
  %v62 = vlaneseq
  %v63 = vshrl.u32 %v62, 7
  %v64 = vsub.s32 0, %v63
  %v65 = vrot.slane %v60, %v64
  %vm67 = vcmask 89088
  %v69 = vsel %vm67, %v20, 0
  %v72 = vsel %vm67, %v21, 0
  %v75 = vsel %vm67, %v22, 0
  %v78 = vsel %vm67, %v23, 0
  %v81 = vsel %vm67, %v24, 0
  %v84 = vsel %vm67, %v25, 0
  %v87 = vsel %vm67, %v26, 0
  %v90 = vsel %vm67, %v27, 0
  %v93 = vsel %vm67, %v28, 0
  %v96 = vsel %vm67, %v29, 0
  %v99 = vsel %vm67, %v30, 0
  %v102 = vsel %vm67, %v31, 0
  %v105 = vsel %vm67, %v32, 0
  %v108 = vsel %vm67, %v33, 0
  %v111 = vsel %vm67, %v34, 0
  %v114 = vsel %vm67, %v35, 0
  %v117 = vsel %vm67, %v36, 0
  %v120 = vsel %vm67, %v37, 0
  %v123 = vsel %vm67, %v38, 0
  %v126 = vsel %vm67, %v39, 0
  %v129 = vsel %vm67, %v40, 0
  %v132 = vsel %vm67, %v41, 0
  %v135 = vsel %vm67, %v42, 0
  %v138 = vsel %vm67, %v43, 0
  %v141 = vsel %vm67, %v44, 0
  %v144 = vsel %vm67, %v45, 0
  %v147 = vsel %vm67, %v46, 0
  %v150 = vsel %vm67, %v47, 0
  %v153 = vsel %vm67, %v48, 0
  %v156 = vsel %vm67, %v49, 0
  %v159 = vsel %vm67, %v50, 0
  %v162 = vsel %vm67, %v51, 0
  %v165 = vsel %vm67, %v52, 0
  %v168 = vsel %vm67, %v53, 0
  %v171 = vsel %vm67, %v54, 0
  %v174 = vsel %vm67, %v55, 0
  %v177 = vsel %vm67, %v56, 0
  %v180 = vsel %vm67, %v57, 0
  %vm182 = vcmask 1042432
  %v184 = vsel %vm182, %v59, 0
  %186 = vmatprep.subr.mxu0 0.0
  %187 = vmatpush1.msra.mxu0 %v58
  %188 = vmatprep.subr.mxu0 0.0
  %189 = vmatpush1.msra.mxu0 %v184
  %190 = vmatprep.subr.mxu0 0.0
  %191 = vmatpush1.msra.mxu0 0.0
  %192 = vmatprep.subr.mxu0 0.0
  %193 = vmatpush1.msra.mxu0 0.0
  %194 = vmatprep.subr.mxu0 0.0
  %195 = vmatpush1.msra.mxu0 0.0
  %196 = vmatprep.subr.mxu0 0.0
  %197 = vmatpush1.msra.mxu0 0.0
  %198 = vmatprep.subr.mxu0 0.0
  %199 = vmatpush1.msra.mxu0 0.0
  %200 = vmatprep.subr.mxu0 0.0
  %201 = vmatpush1.msra.mxu0 0.0
  %202 = vmatprep.subr.mxu0 0.0
  %203 = vmatpush1.msra.mxu0 0.0
  %204 = vmatprep.subr.mxu0 0.0
  %205 = vmatpush1.msra.mxu0 0.0
  %206 = vmatprep.subr.mxu0 0.0
  %207 = vmatpush1.msra.mxu0 0.0
  %208 = vmatprep.subr.mxu0 0.0
  %209 = vmatpush1.msra.mxu0 0.0
  %210 = vmatprep.subr.mxu0 0.0
  %211 = vmatpush1.msra.mxu0 0.0
  %212 = vmatprep.subr.mxu0 0.0
  %213 = vmatpush1.msra.mxu0 0.0
  %214 = vmatprep.subr.mxu0 0.0
  %215 = vmatpush1.msra.mxu0 0.0
  %216 = vmatprep.subr.mxu0 0.0
  %217 = vmatpush1.msra.mxu0 0.0
  %218 = vmatprep.subr.mxu0 0.0
  %219 = vmatpush1.msra.mxu0 0.0
  %220 = vmatprep.subr.mxu0 0.0
  %221 = vmatpush1.msra.mxu0 0.0
  %222 = vmatprep.subr.mxu0 0.0
  %223 = vmatpush1.msra.mxu0 0.0
  %224 = vmatprep.subr.mxu0 0.0
  %225 = vmatpush1.msra.mxu0 0.0
  %226 = vmatprep.subr.mxu0 0.0
  %227 = vmatpush1.msra.mxu0 0.0
  %228 = vmatprep.subr.mxu0 0.0
  %229 = vmatpush1.msra.mxu0 0.0
  %230 = vmatprep.subr.mxu0 0.0
  %231 = vmatpush1.msra.mxu0 0.0
  %232 = vmatprep.subr.mxu0 0.0
  %233 = vmatpush1.msra.mxu0 0.0
  %234 = vmatprep.subr.mxu0 0.0
  %235 = vmatpush1.msra.mxu0 0.0
  %236 = vmatprep.subr.mxu0 0.0
  %237 = vmatpush1.msra.mxu0 0.0
  %238 = vmatprep.subr.mxu0 0.0
  %239 = vmatpush1.msra.mxu0 0.0
  %240 = vmatprep.subr.mxu0 0.0
  %241 = vmatpush1.msra.mxu0 0.0
  %242 = vmatprep.subr.mxu0 0.0
  %243 = vmatpush1.msra.mxu0 0.0
  %244 = vmatprep.subr.mxu0 0.0
  %245 = vmatpush1.msra.mxu0 0.0
  %246 = vmatprep.subr.mxu0 0.0
  %247 = vmatpush1.msra.mxu0 0.0
  %248 = vmatprep.subr.mxu0 0.0
  %249 = vmatpush1.msra.mxu0 0.0
  %250 = vmatprep.mubr.f32.mxu0 0.0
  %251 = vmatmul.mubr.f32.gmra.mrb[0].mxu0 %v69
  %v252 = vpop.f32.mrb[0].mxu0
  %v253 = vadd.f32 %v65, %v252
  %v254 = vpop.f32.mrb[0].mxu0
  %255 = vmatprep.mubr.f32.mxu0 0.0
  %256 = vmatmul.mubr.f32.gmra.mrb[0].mxu0 %v72
  %v257 = vpop.f32.mrb[0].mxu0
  %v258 = vadd.f32 %v65, %v257
  %v259 = vpop.f32.mrb[0].mxu0
  %260 = vmatprep.mubr.f32.mxu0 0.0
  %261 = vmatmul.mubr.f32.gmra.mrb[0].mxu0 %v75
  %v262 = vpop.f32.mrb[0].mxu0
  %v263 = vadd.f32 %v65, %v262
  %v264 = vpop.f32.mrb[0].mxu0
  %265 = vmatprep.mubr.f32.mxu0 0.0
  %266 = vmatmul.mubr.f32.gmra.mrb[0].mxu0 %v78
  %v267 = vpop.f32.mrb[0].mxu0
  %v268 = vadd.f32 %v65, %v267
  %v269 = vpop.f32.mrb[0].mxu0
  %270 = vmatprep.mubr.f32.mxu0 0.0
  %271 = vmatmul.mubr.f32.gmra.mrb[0].mxu0 %v81
  %v272 = vpop.f32.mrb[0].mxu0
  %v273 = vadd.f32 %v65, %v272
  %v274 = vpop.f32.mrb[0].mxu0
  %275 = vmatprep.mubr.f32.mxu0 0.0
  %276 = vmatmul.mubr.f32.gmra.mrb[0].mxu0 %v84
  %v277 = vpop.f32.mrb[0].mxu0
  %v278 = vadd.f32 %v65, %v277
  %v279 = vpop.f32.mrb[0].mxu0
  %280 = vmatprep.mubr.f32.mxu0 0.0
  %281 = vmatmul.mubr.f32.gmra.mrb[0].mxu0 %v87
  %v282 = vpop.f32.mrb[0].mxu0
  %v283 = vadd.f32 %v65, %v282
  %v284 = vpop.f32.mrb[0].mxu0
  %285 = vmatprep.mubr.f32.mxu0 0.0
  %286 = vmatmul.mubr.f32.gmra.mrb[0].mxu0 %v90
  %v287 = vpop.f32.mrb[0].mxu0
  %v288 = vadd.f32 %v65, %v287
  %v289 = vpop.f32.mrb[0].mxu0
  %290 = vmatprep.mubr.f32.mxu0 0.0
  %291 = vmatmul.mubr.f32.gmra.mrb[0].mxu0 %v93
  %v292 = vpop.f32.mrb[0].mxu0
  %v293 = vadd.f32 %v65, %v292
  %v294 = vpop.f32.mrb[0].mxu0
  %295 = vmatprep.mubr.f32.mxu0 0.0
  %296 = vmatmul.mubr.f32.gmra.mrb[0].mxu0 %v96
  %v297 = vpop.f32.mrb[0].mxu0
  %v298 = vadd.f32 %v65, %v297
  %v299 = vpop.f32.mrb[0].mxu0
  %300 = vmatprep.mubr.f32.mxu0 0.0
  %301 = vmatmul.mubr.f32.gmra.mrb[0].mxu0 %v99
  %v302 = vpop.f32.mrb[0].mxu0
  %v303 = vadd.f32 %v65, %v302
  %v304 = vpop.f32.mrb[0].mxu0
  %305 = vmatprep.mubr.f32.mxu0 0.0
  %306 = vmatmul.mubr.f32.gmra.mrb[0].mxu0 %v102
  %v307 = vpop.f32.mrb[0].mxu0
  %v308 = vadd.f32 %v65, %v307
  %v309 = vpop.f32.mrb[0].mxu0
  %310 = vmatprep.mubr.f32.mxu0 0.0
  %311 = vmatmul.mubr.f32.gmra.mrb[0].mxu0 %v105
  %v312 = vpop.f32.mrb[0].mxu0
  %v313 = vadd.f32 %v65, %v312
  %v314 = vpop.f32.mrb[0].mxu0
  %315 = vmatprep.mubr.f32.mxu0 0.0
  %316 = vmatmul.mubr.f32.gmra.mrb[0].mxu0 %v108
  %v317 = vpop.f32.mrb[0].mxu0
  %v318 = vadd.f32 %v65, %v317
  %v319 = vpop.f32.mrb[0].mxu0
  %320 = vmatprep.mubr.f32.mxu0 0.0
  %321 = vmatmul.mubr.f32.gmra.mrb[0].mxu0 %v111
  %v322 = vpop.f32.mrb[0].mxu0
  %v323 = vadd.f32 %v65, %v322
  %v324 = vpop.f32.mrb[0].mxu0
  %325 = vmatprep.mubr.f32.mxu0 0.0
  %326 = vmatmul.mubr.f32.gmra.mrb[0].mxu0 %v114
  %v327 = vpop.f32.mrb[0].mxu0
  %v328 = vadd.f32 %v65, %v327
  %v329 = vpop.f32.mrb[0].mxu0
  %330 = vmatprep.mubr.f32.mxu0 0.0
  %331 = vmatmul.mubr.f32.gmra.mrb[0].mxu0 %v117
  %v332 = vpop.f32.mrb[0].mxu0
  %v333 = vadd.f32 %v65, %v332
  %v334 = vpop.f32.mrb[0].mxu0
  %335 = vmatprep.mubr.f32.mxu0 0.0
  %336 = vmatmul.mubr.f32.gmra.mrb[0].mxu0 %v120
  %v337 = vpop.f32.mrb[0].mxu0
  %v338 = vadd.f32 %v65, %v337
  %v339 = vpop.f32.mrb[0].mxu0
  %340 = vmatprep.mubr.f32.mxu0 0.0
  %341 = vmatmul.mubr.f32.gmra.mrb[0].mxu0 %v123
  %v342 = vpop.f32.mrb[0].mxu0
  %v343 = vadd.f32 %v65, %v342
  %v344 = vpop.f32.mrb[0].mxu0
  %345 = vmatprep.mubr.f32.mxu0 0.0
  %346 = vmatmul.mubr.f32.gmra.mrb[0].mxu0 %v126
  %v347 = vpop.f32.mrb[0].mxu0
  %v348 = vadd.f32 %v65, %v347
  %v349 = vpop.f32.mrb[0].mxu0
  %350 = vmatprep.mubr.f32.mxu0 0.0
  %351 = vmatmul.mubr.f32.gmra.mrb[0].mxu0 %v129
  %v352 = vpop.f32.mrb[0].mxu0
  %v353 = vadd.f32 %v65, %v352
  %v354 = vpop.f32.mrb[0].mxu0
  %355 = vmatprep.mubr.f32.mxu0 0.0
  %356 = vmatmul.mubr.f32.gmra.mrb[0].mxu0 %v132
  %v357 = vpop.f32.mrb[0].mxu0
  %v358 = vadd.f32 %v65, %v357
  %v359 = vpop.f32.mrb[0].mxu0
  %360 = vmatprep.mubr.f32.mxu0 0.0
  %361 = vmatmul.mubr.f32.gmra.mrb[0].mxu0 %v135
  %v362 = vpop.f32.mrb[0].mxu0
  %v363 = vadd.f32 %v65, %v362
  %v364 = vpop.f32.mrb[0].mxu0
  %365 = vmatprep.mubr.f32.mxu0 0.0
  %366 = vmatmul.mubr.f32.gmra.mrb[0].mxu0 %v138
  %v367 = vpop.f32.mrb[0].mxu0
  %v368 = vadd.f32 %v65, %v367
  %v369 = vpop.f32.mrb[0].mxu0
  %370 = vmatprep.mubr.f32.mxu0 0.0
  %371 = vmatmul.mubr.f32.gmra.mrb[0].mxu0 %v141
  %v372 = vpop.f32.mrb[0].mxu0
  %v373 = vadd.f32 %v65, %v372
  %v374 = vpop.f32.mrb[0].mxu0
  %375 = vmatprep.mubr.f32.mxu0 0.0
  %376 = vmatmul.mubr.f32.gmra.mrb[0].mxu0 %v144
  %v377 = vpop.f32.mrb[0].mxu0
  %v378 = vadd.f32 %v65, %v377
  %v379 = vpop.f32.mrb[0].mxu0
  %380 = vmatprep.mubr.f32.mxu0 0.0
  %381 = vmatmul.mubr.f32.gmra.mrb[0].mxu0 %v147
  %v382 = vpop.f32.mrb[0].mxu0
  %v383 = vadd.f32 %v65, %v382
  %v384 = vpop.f32.mrb[0].mxu0
  %385 = vmatprep.mubr.f32.mxu0 0.0
  %386 = vmatmul.mubr.f32.gmra.mrb[0].mxu0 %v150
  %v387 = vpop.f32.mrb[0].mxu0
  %v388 = vadd.f32 %v65, %v387
  %v389 = vpop.f32.mrb[0].mxu0
  %390 = vmatprep.mubr.f32.mxu0 0.0
  %391 = vmatmul.mubr.f32.gmra.mrb[0].mxu0 %v153
  %v392 = vpop.f32.mrb[0].mxu0
  %v393 = vadd.f32 %v65, %v392
  %v394 = vpop.f32.mrb[0].mxu0
  %395 = vmatprep.mubr.f32.mxu0 0.0
  %396 = vmatmul.mubr.f32.gmra.mrb[0].mxu0 %v156
  %v397 = vpop.f32.mrb[0].mxu0
  %v398 = vadd.f32 %v65, %v397
  %v399 = vpop.f32.mrb[0].mxu0
  %400 = vmatprep.mubr.f32.mxu0 0.0
  %401 = vmatmul.mubr.f32.gmra.mrb[0].mxu0 %v159
  %v402 = vpop.f32.mrb[0].mxu0
  %v403 = vadd.f32 %v65, %v402
  %v404 = vpop.f32.mrb[0].mxu0
  %405 = vmatprep.mubr.f32.mxu0 0.0
  %406 = vmatmul.mubr.f32.gmra.mrb[0].mxu0 %v162
  %v407 = vpop.f32.mrb[0].mxu0
  %v408 = vadd.f32 %v65, %v407
  %v409 = vpop.f32.mrb[0].mxu0
  %410 = vmatprep.mubr.f32.mxu0 0.0
  %411 = vmatmul.mubr.f32.gmra.mrb[0].mxu0 %v165
  %v412 = vpop.f32.mrb[0].mxu0
  %v413 = vadd.f32 %v65, %v412
  %v414 = vpop.f32.mrb[0].mxu0
  %415 = vmatprep.mubr.f32.mxu0 0.0
  %416 = vmatmul.mubr.f32.gmra.mrb[0].mxu0 %v168
  %v417 = vpop.f32.mrb[0].mxu0
  %v418 = vadd.f32 %v65, %v417
  %v419 = vpop.f32.mrb[0].mxu0
  %420 = vmatprep.mubr.f32.mxu0 0.0
  %421 = vmatmul.mubr.f32.gmra.mrb[0].mxu0 %v171
  %v422 = vpop.f32.mrb[0].mxu0
  %v423 = vadd.f32 %v65, %v422
  %v424 = vpop.f32.mrb[0].mxu0
  %425 = vmatprep.mubr.f32.mxu0 0.0
  %426 = vmatmul.mubr.f32.gmra.mrb[0].mxu0 %v174
  %v427 = vpop.f32.mrb[0].mxu0
  %v428 = vadd.f32 %v65, %v427
  %v429 = vpop.f32.mrb[0].mxu0
  %430 = vmatprep.mubr.f32.mxu0 0.0
  %431 = vmatmul.mubr.f32.gmra.mrb[0].mxu0 %v177
  %v432 = vpop.f32.mrb[0].mxu0
  %v433 = vadd.f32 %v65, %v432
  %v434 = vpop.f32.mrb[0].mxu0
  %435 = vmatprep.mubr.f32.mxu0 0.0
  %436 = vmatmul.mubr.f32.gmra.mrb[0].mxu0 %v180
  %v437 = vpop.f32.mrb[0].mxu0
  %v438 = vadd.f32 %v65, %v437
  %v439 = vpop.f32.mrb[0].mxu0
  %440 = vdwg.mxu0
  %v441 = vmax.f32 %v253, 0.0
  %v442 = vmax.f32 %v258, 0.0
  %v443 = vmax.f32 %v263, 0.0
  %v444 = vmax.f32 %v268, 0.0
  %v445 = vmax.f32 %v273, 0.0
  %v446 = vmax.f32 %v278, 0.0
  %v447 = vmax.f32 %v283, 0.0
  %v448 = vmax.f32 %v288, 0.0
  %v449 = vmax.f32 %v293, 0.0
  %v450 = vmax.f32 %v298, 0.0
  %v451 = vmax.f32 %v303, 0.0
  %v452 = vmax.f32 %v308, 0.0
  %v453 = vmax.f32 %v313, 0.0
  %v454 = vmax.f32 %v318, 0.0
  %v455 = vmax.f32 %v323, 0.0
  %v456 = vmax.f32 %v328, 0.0
  %v457 = vmax.f32 %v333, 0.0
  %v458 = vmax.f32 %v338, 0.0
  %v459 = vmax.f32 %v343, 0.0
  %v460 = vmax.f32 %v348, 0.0
  %v461 = vmax.f32 %v353, 0.0
  %v462 = vmax.f32 %v358, 0.0
  %v463 = vmax.f32 %v363, 0.0
  %v464 = vmax.f32 %v368, 0.0
  %v465 = vmax.f32 %v373, 0.0
  %v466 = vmax.f32 %v378, 0.0
  %v467 = vmax.f32 %v383, 0.0
  %v468 = vmax.f32 %v388, 0.0
  %v469 = vmax.f32 %v393, 0.0
  %v470 = vmax.f32 %v398, 0.0
  %v471 = vmax.f32 %v403, 0.0
  %v472 = vmax.f32 %v408, 0.0
  %v473 = vmax.f32 %v413, 0.0
  %v474 = vmax.f32 %v418, 0.0
  %v475 = vmax.f32 %v423, 0.0
  %v476 = vmax.f32 %v428, 0.0
  %v477 = vmax.f32 %v433, 0.0
  %v478 = vmax.f32 %v438, 0.0
  %v479 = vld [vmem:[%s3] sm:$0xff]
  %v480 = vld [vmem:[%s3 + $0x8] sm:$0xff]
  %v481 = vld [vmem:[%s3 + $0x10] sm:$0xff]
  %v482 = vld [vmem:[%s3 + $0x18] sm:$0xff]
  %v483 = vld [vmem:[%s4] sm:$0x1]
  %v485 = vlaneseq
  %v486 = vshrl.u32 %v485, 7
  %v487 = vsub.s32 0, %v486
  %v488 = vrot.slane %v483, %v487
  %vm490 = vcmask 261120
  %v492 = vsel %vm490, %v441, 0
  %v495 = vsel %vm490, %v442, 0
  %v498 = vsel %vm490, %v443, 0
  %v501 = vsel %vm490, %v444, 0
  %v504 = vsel %vm490, %v445, 0
  %v507 = vsel %vm490, %v446, 0
  %v510 = vsel %vm490, %v447, 0
  %v513 = vsel %vm490, %v448, 0
  %v516 = vsel %vm490, %v449, 0
  %v519 = vsel %vm490, %v450, 0
  %v522 = vsel %vm490, %v451, 0
  %v525 = vsel %vm490, %v452, 0
  %v528 = vsel %vm490, %v453, 0
  %v531 = vsel %vm490, %v454, 0
  %v534 = vsel %vm490, %v455, 0
  %v537 = vsel %vm490, %v456, 0
  %v540 = vsel %vm490, %v457, 0
  %v543 = vsel %vm490, %v458, 0
  %v546 = vsel %vm490, %v459, 0
  %v549 = vsel %vm490, %v460, 0
  %v552 = vsel %vm490, %v461, 0
  %v555 = vsel %vm490, %v462, 0
  %v558 = vsel %vm490, %v463, 0
  %v561 = vsel %vm490, %v464, 0
  %v564 = vsel %vm490, %v465, 0
  %v567 = vsel %vm490, %v466, 0
  %v570 = vsel %vm490, %v467, 0
  %v573 = vsel %vm490, %v468, 0
  %v576 = vsel %vm490, %v469, 0
  %v579 = vsel %vm490, %v470, 0
  %v582 = vsel %vm490, %v471, 0
  %v585 = vsel %vm490, %v472, 0
  %v588 = vsel %vm490, %v473, 0
  %v591 = vsel %vm490, %v474, 0
  %v594 = vsel %vm490, %v475, 0
  %v597 = vsel %vm490, %v476, 0
  %v600 = vsel %vm490, %v477, 0
  %v603 = vsel %vm490, %v478, 0
  %605 = vmatprep.subr.mxu0 0.0
  %606 = vmatpush1.msra.mxu0 %v479
  %607 = vmatprep.subr.mxu0 0.0
  %608 = vmatpush1.msra.mxu0 %v480
  %609 = vmatprep.subr.mxu0 0.0
  %610 = vmatpush1.msra.mxu0 %v481
  %611 = vmatprep.subr.mxu0 0.0
  %612 = vmatpush1.msra.mxu0 %v482
  %613 = vmatprep.subr.mxu0 0.0
  %614 = vmatpush1.msra.mxu0 0.0
  %615 = vmatprep.subr.mxu0 0.0
  %616 = vmatpush1.msra.mxu0 0.0
  %617 = vmatprep.subr.mxu0 0.0
  %618 = vmatpush1.msra.mxu0 0.0
  %619 = vmatprep.subr.mxu0 0.0
  %620 = vmatpush1.msra.mxu0 0.0
  %621 = vmatprep.subr.mxu0 0.0
  %622 = vmatpush1.msra.mxu0 0.0
  %623 = vmatprep.subr.mxu0 0.0
  %624 = vmatpush1.msra.mxu0 0.0
  %625 = vmatprep.subr.mxu0 0.0
  %626 = vmatpush1.msra.mxu0 0.0
  %627 = vmatprep.subr.mxu0 0.0
  %628 = vmatpush1.msra.mxu0 0.0
  %629 = vmatprep.subr.mxu0 0.0
  %630 = vmatpush1.msra.mxu0 0.0
  %631 = vmatprep.subr.mxu0 0.0
  %632 = vmatpush1.msra.mxu0 0.0
  %633 = vmatprep.subr.mxu0 0.0
  %634 = vmatpush1.msra.mxu0 0.0
  %635 = vmatprep.subr.mxu0 0.0
  %636 = vmatpush1.msra.mxu0 0.0
  %637 = vmatprep.subr.mxu0 0.0
  %638 = vmatpush1.msra.mxu0 0.0
  %639 = vmatprep.subr.mxu0 0.0
  %640 = vmatpush1.msra.mxu0 0.0
  %641 = vmatprep.subr.mxu0 0.0
  %642 = vmatpush1.msra.mxu0 0.0
  %643 = vmatprep.subr.mxu0 0.0
  %644 = vmatpush1.msra.mxu0 0.0
  %645 = vmatprep.subr.mxu0 0.0
  %646 = vmatpush1.msra.mxu0 0.0
  %647 = vmatprep.subr.mxu0 0.0
  %648 = vmatpush1.msra.mxu0 0.0
  %649 = vmatprep.subr.mxu0 0.0
  %650 = vmatpush1.msra.mxu0 0.0
  %651 = vmatprep.subr.mxu0 0.0
  %652 = vmatpush1.msra.mxu0 0.0
  %653 = vmatprep.subr.mxu0 0.0
  %654 = vmatpush1.msra.mxu0 0.0
  %655 = vmatprep.subr.mxu0 0.0
  %656 = vmatpush1.msra.mxu0 0.0
  %657 = vmatprep.subr.mxu0 0.0
  %658 = vmatpush1.msra.mxu0 0.0
  %659 = vmatprep.subr.mxu0 0.0
  %660 = vmatpush1.msra.mxu0 0.0
  %661 = vmatprep.subr.mxu0 0.0
  %662 = vmatpush1.msra.mxu0 0.0
  %663 = vmatprep.subr.mxu0 0.0
  %664 = vmatpush1.msra.mxu0 0.0
  %665 = vmatprep.subr.mxu0 0.0
  %666 = vmatpush1.msra.mxu0 0.0
  %667 = vmatprep.subr.mxu0 0.0
  %668 = vmatpush1.msra.mxu0 0.0
  %669 = vmatprep.mubr.f32.mxu0 0.0
  %670 = vmatmul.mubr.f32.gmra.mrb[0].mxu0 %v492
  %v671 = vpop.f32.mrb[0].mxu0
  %v672 = vadd.f32 %v488, %v671
  %v673 = vpop.f32.mrb[0].mxu0
  %674 = vmatprep.mubr.f32.mxu0 0.0
  %675 = vmatmul.mubr.f32.gmra.mrb[0].mxu0 %v495
  %v676 = vpop.f32.mrb[0].mxu0
  %v677 = vadd.f32 %v488, %v676
  %v678 = vpop.f32.mrb[0].mxu0
  %679 = vmatprep.mubr.f32.mxu0 0.0
  %680 = vmatmul.mubr.f32.gmra.mrb[0].mxu0 %v498
  %v681 = vpop.f32.mrb[0].mxu0
  %v682 = vadd.f32 %v488, %v681
  %v683 = vpop.f32.mrb[0].mxu0
  %684 = vmatprep.mubr.f32.mxu0 0.0
  %685 = vmatmul.mubr.f32.gmra.mrb[0].mxu0 %v501
  %v686 = vpop.f32.mrb[0].mxu0
  %v687 = vadd.f32 %v488, %v686
  %v688 = vpop.f32.mrb[0].mxu0
  %689 = vmatprep.mubr.f32.mxu0 0.0
  %690 = vmatmul.mubr.f32.gmra.mrb[0].mxu0 %v504
  %v691 = vpop.f32.mrb[0].mxu0
  %v692 = vadd.f32 %v488, %v691
  %v693 = vpop.f32.mrb[0].mxu0
  %694 = vmatprep.mubr.f32.mxu0 0.0
  %695 = vmatmul.mubr.f32.gmra.mrb[0].mxu0 %v507
  %v696 = vpop.f32.mrb[0].mxu0
  %v697 = vadd.f32 %v488, %v696
  %v698 = vpop.f32.mrb[0].mxu0
  %699 = vmatprep.mubr.f32.mxu0 0.0
  %700 = vmatmul.mubr.f32.gmra.mrb[0].mxu0 %v510
  %v701 = vpop.f32.mrb[0].mxu0
  %v702 = vadd.f32 %v488, %v701
  %v703 = vpop.f32.mrb[0].mxu0
  %704 = vmatprep.mubr.f32.mxu0 0.0
  %705 = vmatmul.mubr.f32.gmra.mrb[0].mxu0 %v513
  %v706 = vpop.f32.mrb[0].mxu0
  %v707 = vadd.f32 %v488, %v706
  %v708 = vpop.f32.mrb[0].mxu0
  %709 = vmatprep.mubr.f32.mxu0 0.0
  %710 = vmatmul.mubr.f32.gmra.mrb[0].mxu0 %v516
  %v711 = vpop.f32.mrb[0].mxu0
  %v712 = vadd.f32 %v488, %v711
  %v713 = vpop.f32.mrb[0].mxu0
  %714 = vmatprep.mubr.f32.mxu0 0.0
  %715 = vmatmul.mubr.f32.gmra.mrb[0].mxu0 %v519
  %v716 = vpop.f32.mrb[0].mxu0
  %v717 = vadd.f32 %v488, %v716
  %v718 = vpop.f32.mrb[0].mxu0
  %719 = vmatprep.mubr.f32.mxu0 0.0
  %720 = vmatmul.mubr.f32.gmra.mrb[0].mxu0 %v522
  %v721 = vpop.f32.mrb[0].mxu0
  %v722 = vadd.f32 %v488, %v721
  %v723 = vpop.f32.mrb[0].mxu0
  %724 = vmatprep.mubr.f32.mxu0 0.0
  %725 = vmatmul.mubr.f32.gmra.mrb[0].mxu0 %v525
  %v726 = vpop.f32.mrb[0].mxu0
  %v727 = vadd.f32 %v488, %v726
  %v728 = vpop.f32.mrb[0].mxu0
  %729 = vmatprep.mubr.f32.mxu0 0.0
  %730 = vmatmul.mubr.f32.gmra.mrb[0].mxu0 %v528
  %v731 = vpop.f32.mrb[0].mxu0
  %v732 = vadd.f32 %v488, %v731
  %v733 = vpop.f32.mrb[0].mxu0
  %734 = vmatprep.mubr.f32.mxu0 0.0
  %735 = vmatmul.mubr.f32.gmra.mrb[0].mxu0 %v531
  %v736 = vpop.f32.mrb[0].mxu0
  %v737 = vadd.f32 %v488, %v736
  %v738 = vpop.f32.mrb[0].mxu0
  %739 = vmatprep.mubr.f32.mxu0 0.0
  %740 = vmatmul.mubr.f32.gmra.mrb[0].mxu0 %v534
  %v741 = vpop.f32.mrb[0].mxu0
  %v742 = vadd.f32 %v488, %v741
  %v743 = vpop.f32.mrb[0].mxu0
  %744 = vmatprep.mubr.f32.mxu0 0.0
  %745 = vmatmul.mubr.f32.gmra.mrb[0].mxu0 %v537
  %v746 = vpop.f32.mrb[0].mxu0
  %v747 = vadd.f32 %v488, %v746
  %v748 = vpop.f32.mrb[0].mxu0
  %749 = vmatprep.mubr.f32.mxu0 0.0
  %750 = vmatmul.mubr.f32.gmra.mrb[0].mxu0 %v540
  %v751 = vpop.f32.mrb[0].mxu0
  %v752 = vadd.f32 %v488, %v751
  %v753 = vpop.f32.mrb[0].mxu0
  %754 = vmatprep.mubr.f32.mxu0 0.0
  %755 = vmatmul.mubr.f32.gmra.mrb[0].mxu0 %v543
  %v756 = vpop.f32.mrb[0].mxu0
  %v757 = vadd.f32 %v488, %v756
  %v758 = vpop.f32.mrb[0].mxu0
  %759 = vmatprep.mubr.f32.mxu0 0.0
  %760 = vmatmul.mubr.f32.gmra.mrb[0].mxu0 %v546
  %v761 = vpop.f32.mrb[0].mxu0
  %v762 = vadd.f32 %v488, %v761
  %v763 = vpop.f32.mrb[0].mxu0
  %764 = vmatprep.mubr.f32.mxu0 0.0
  %765 = vmatmul.mubr.f32.gmra.mrb[0].mxu0 %v549
  %v766 = vpop.f32.mrb[0].mxu0
  %v767 = vadd.f32 %v488, %v766
  %v768 = vpop.f32.mrb[0].mxu0
  %769 = vmatprep.mubr.f32.mxu0 0.0
  %770 = vmatmul.mubr.f32.gmra.mrb[0].mxu0 %v552
  %v771 = vpop.f32.mrb[0].mxu0
  %v772 = vadd.f32 %v488, %v771
  %v773 = vpop.f32.mrb[0].mxu0
  %774 = vmatprep.mubr.f32.mxu0 0.0
  %775 = vmatmul.mubr.f32.gmra.mrb[0].mxu0 %v555
  %v776 = vpop.f32.mrb[0].mxu0
  %v777 = vadd.f32 %v488, %v776
  %v778 = vpop.f32.mrb[0].mxu0
  %779 = vmatprep.mubr.f32.mxu0 0.0
  %780 = vmatmul.mubr.f32.gmra.mrb[0].mxu0 %v558
  %v781 = vpop.f32.mrb[0].mxu0
  %v782 = vadd.f32 %v488, %v781
  %v783 = vpop.f32.mrb[0].mxu0
  %784 = vmatprep.mubr.f32.mxu0 0.0
  %785 = vmatmul.mubr.f32.gmra.mrb[0].mxu0 %v561
  %v786 = vpop.f32.mrb[0].mxu0
  %v787 = vadd.f32 %v488, %v786
  %v788 = vpop.f32.mrb[0].mxu0
  %789 = vmatprep.mubr.f32.mxu0 0.0
  %790 = vmatmul.mubr.f32.gmra.mrb[0].mxu0 %v564
  %v791 = vpop.f32.mrb[0].mxu0
  %v792 = vadd.f32 %v488, %v791
  %v793 = vpop.f32.mrb[0].mxu0
  %794 = vmatprep.mubr.f32.mxu0 0.0
  %795 = vmatmul.mubr.f32.gmra.mrb[0].mxu0 %v567
  %v796 = vpop.f32.mrb[0].mxu0
  %v797 = vadd.f32 %v488, %v796
  %v798 = vpop.f32.mrb[0].mxu0
  %799 = vmatprep.mubr.f32.mxu0 0.0
  %800 = vmatmul.mubr.f32.gmra.mrb[0].mxu0 %v570
  %v801 = vpop.f32.mrb[0].mxu0
  %v802 = vadd.f32 %v488, %v801
  %v803 = vpop.f32.mrb[0].mxu0
  %804 = vmatprep.mubr.f32.mxu0 0.0
  %805 = vmatmul.mubr.f32.gmra.mrb[0].mxu0 %v573
  %v806 = vpop.f32.mrb[0].mxu0
  %v807 = vadd.f32 %v488, %v806
  %v808 = vpop.f32.mrb[0].mxu0
  %809 = vmatprep.mubr.f32.mxu0 0.0
  %810 = vmatmul.mubr.f32.gmra.mrb[0].mxu0 %v576
  %v811 = vpop.f32.mrb[0].mxu0
  %v812 = vadd.f32 %v488, %v811
  %v813 = vpop.f32.mrb[0].mxu0
  %814 = vmatprep.mubr.f32.mxu0 0.0
  %815 = vmatmul.mubr.f32.gmra.mrb[0].mxu0 %v579
  %v816 = vpop.f32.mrb[0].mxu0
  %v817 = vadd.f32 %v488, %v816
  %v818 = vpop.f32.mrb[0].mxu0
  %819 = vmatprep.mubr.f32.mxu0 0.0
  %820 = vmatmul.mubr.f32.gmra.mrb[0].mxu0 %v582
  %v821 = vpop.f32.mrb[0].mxu0
  %v822 = vadd.f32 %v488, %v821
  %v823 = vpop.f32.mrb[0].mxu0
  %824 = vmatprep.mubr.f32.mxu0 0.0
  %825 = vmatmul.mubr.f32.gmra.mrb[0].mxu0 %v585
  %v826 = vpop.f32.mrb[0].mxu0
  %v827 = vadd.f32 %v488, %v826
  %v828 = vpop.f32.mrb[0].mxu0
  %829 = vmatprep.mubr.f32.mxu0 0.0
  %830 = vmatmul.mubr.f32.gmra.mrb[0].mxu0 %v588
  %v831 = vpop.f32.mrb[0].mxu0
  %v832 = vadd.f32 %v488, %v831
  %v833 = vpop.f32.mrb[0].mxu0
  %834 = vmatprep.mubr.f32.mxu0 0.0
  %835 = vmatmul.mubr.f32.gmra.mrb[0].mxu0 %v591
  %v836 = vpop.f32.mrb[0].mxu0
  %v837 = vadd.f32 %v488, %v836
  %v838 = vpop.f32.mrb[0].mxu0
  %839 = vmatprep.mubr.f32.mxu0 0.0
  %840 = vmatmul.mubr.f32.gmra.mrb[0].mxu0 %v594
  %v841 = vpop.f32.mrb[0].mxu0
  %v842 = vadd.f32 %v488, %v841
  %v843 = vpop.f32.mrb[0].mxu0
  %844 = vmatprep.mubr.f32.mxu0 0.0
  %845 = vmatmul.mubr.f32.gmra.mrb[0].mxu0 %v597
  %v846 = vpop.f32.mrb[0].mxu0
  %v847 = vadd.f32 %v488, %v846
  %v848 = vpop.f32.mrb[0].mxu0
  %849 = vmatprep.mubr.f32.mxu0 0.0
  %850 = vmatmul.mubr.f32.gmra.mrb[0].mxu0 %v600
  %v851 = vpop.f32.mrb[0].mxu0
  %v852 = vadd.f32 %v488, %v851
  %v853 = vpop.f32.mrb[0].mxu0
  %854 = vmatprep.mubr.f32.mxu0 0.0
  %855 = vmatmul.mubr.f32.gmra.mrb[0].mxu0 %v603
  %v856 = vpop.f32.mrb[0].mxu0
  %v857 = vadd.f32 %v488, %v856
  %v858 = vpop.f32.mrb[0].mxu0
  %859 = vdwg.mxu0
  %vm860 = vcmask 23552
  %861 = vst.msk [vmem:[%s5] sm:$0xff] %vm860, %v672
  %862 = vst.msk [vmem:[%s5 + $0x8] sm:$0xff] %vm860, %v677
  %863 = vst.msk [vmem:[%s5 + $0x10] sm:$0xff] %vm860, %v682
  %864 = vst.msk [vmem:[%s5 + $0x18] sm:$0xff] %vm860, %v687
  %865 = vst.msk [vmem:[%s5 + $0x20] sm:$0xff] %vm860, %v692
  %866 = vst.msk [vmem:[%s5 + $0x28] sm:$0xff] %vm860, %v697
  %867 = vst.msk [vmem:[%s5 + $0x30] sm:$0xff] %vm860, %v702
  %868 = vst.msk [vmem:[%s5 + $0x38] sm:$0xff] %vm860, %v707
  %869 = vst.msk [vmem:[%s5 + $0x40] sm:$0xff] %vm860, %v712
  %870 = vst.msk [vmem:[%s5 + $0x48] sm:$0xff] %vm860, %v717
  %871 = vst.msk [vmem:[%s5 + $0x50] sm:$0xff] %vm860, %v722
  %872 = vst.msk [vmem:[%s5 + $0x58] sm:$0xff] %vm860, %v727
  %873 = vst.msk [vmem:[%s5 + $0x60] sm:$0xff] %vm860, %v732
  %874 = vst.msk [vmem:[%s5 + $0x68] sm:$0xff] %vm860, %v737
  %875 = vst.msk [vmem:[%s5 + $0x70] sm:$0xff] %vm860, %v742
  %876 = vst.msk [vmem:[%s5 + $0x78] sm:$0xff] %vm860, %v747
  %877 = vst.msk [vmem:[%s5 + $0x80] sm:$0xff] %vm860, %v752
  %878 = vst.msk [vmem:[%s5 + $0x88] sm:$0xff] %vm860, %v757
  %879 = vst.msk [vmem:[%s5 + $0x90] sm:$0xff] %vm860, %v762
  %880 = vst.msk [vmem:[%s5 + $0x98] sm:$0xff] %vm860, %v767
  %881 = vst.msk [vmem:[%s5 + $0xa0] sm:$0xff] %vm860, %v772
  %882 = vst.msk [vmem:[%s5 + $0xa8] sm:$0xff] %vm860, %v777
  %883 = vst.msk [vmem:[%s5 + $0xb0] sm:$0xff] %vm860, %v782
  %884 = vst.msk [vmem:[%s5 + $0xb8] sm:$0xff] %vm860, %v787
  %885 = vst.msk [vmem:[%s5 + $0xc0] sm:$0xff] %vm860, %v792
  %886 = vst.msk [vmem:[%s5 + $0xc8] sm:$0xff] %vm860, %v797
  %887 = vst.msk [vmem:[%s5 + $0xd0] sm:$0xff] %vm860, %v802
  %888 = vst.msk [vmem:[%s5 + $0xd8] sm:$0xff] %vm860, %v807
  %889 = vst.msk [vmem:[%s5 + $0xe0] sm:$0xff] %vm860, %v812
  %890 = vst.msk [vmem:[%s5 + $0xe8] sm:$0xff] %vm860, %v817
  %891 = vst.msk [vmem:[%s5 + $0xf0] sm:$0xff] %vm860, %v822
  %892 = vst.msk [vmem:[%s5 + $0xf8] sm:$0xff] %vm860, %v827
  %893 = vst.msk [vmem:[%s5 + $0x100] sm:$0xff] %vm860, %v832
  %894 = vst.msk [vmem:[%s5 + $0x108] sm:$0xff] %vm860, %v837
  %895 = vst.msk [vmem:[%s5 + $0x110] sm:$0xff] %vm860, %v842
  %896 = vst.msk [vmem:[%s5 + $0x118] sm:$0xff] %vm860, %v847
  %897 = vst.msk [vmem:[%s5 + $0x120] sm:$0xff] %vm860, %v852
  %898 = vst.msk [vmem:[%s5 + $0x128] sm:$0xff] %vm860, %v857
  // Predicated region
  $region22: #{tpu_custom_call.1} parent=0 // pred_check
    _
  $region23: #{tpu_custom_call.1} parent=0 // pred_check_branch
    %900 = sbr.rel (0) target = $region25
  $region24: #{tpu_custom_call.1} parent=0 // pred_region
    _
  $region25: #{tpu_custom_call.1} parent=0 // pred_fallthru
    _
  // Predicated region
  $region26: #{tpu_custom_call.1} parent=0 // pred_check
    _
  $region27: #{tpu_custom_call.1} parent=0 // pred_check_branch
    %902 = sbr.rel (0) target = $region29
  $region28: #{tpu_custom_call.1} parent=0 // pred_region
    _
  $region29: #{tpu_custom_call.1} parent=0 // pred_fallthru
    _

</llo_original>
